<compile_context>
chip_gen: v7x
topology: tpu7x:2x2x1
jax: 0.10.0
libtpu: 0.0.40
codegen_flags: <defaults>
</compile_context>

<pallas_src>
import functools
import math

import jax
import jax.numpy as jnp
from jax.experimental import pallas as pl
from jax.experimental.pallas import tpu as pltpu

GMIN = 0.01
GMAX = 0.1
LANE = 128


def _round_up(x, m):
    return ((x + m - 1) // m) * m


# ----------------------------------------------------------------------------
# Fused Pallas kernel: every pLayer of the pNN in a single launch (no grid).
# ----------------------------------------------------------------------------
def _make_pnn_kernel(pre_affine, zscale, zshift, out_a0, out_a1):
    """pre_affine: per-layer (scale, shift) for the INV tanh argument.
    zscale/zshift: ACT tanh argument affine (shared by all layers).
    out_a0/out_a1: final-layer ACT output affine."""
    n_layers = len(pre_affine)

    def kernel(x_ref, w_ref, b_ref, out_ref):
        # h carries the "raw tanh" state:
        #   h_0 = X ;   h_l = tanh((z_{l-1} - ea2) * ea3)   for l > 0
        # (the ea0 + ea1*h affine of intermediate layers is folded into the
        #  next layer's weights/bias at prepare time).
        h = x_ref[...]                                          # (E, lane) f32
        for l in range(n_layers):                               # unrolled
            scale, shift = pre_affine[l]
            t = jnp.tanh(h * scale + shift)                     # == tanh((a - ei2)*ei3), EUP
            z = (jnp.dot(h.astype(jnp.bfloat16), w_ref[2 * l],
                         preferred_element_type=jnp.float32)
                 + jnp.dot(t.astype(jnp.bfloat16), w_ref[2 * l + 1],
                           preferred_element_type=jnp.float32)
                 + b_ref[l:l + 1, :])                           # (1, lane) broadcast
            h = jnp.tanh(z * zscale + zshift)                   # tanh((z - ea2)*ea3)
        out_ref[...] = out_a0 + out_a1 * h                      # final ACT affine

    return kernel


# ----------------------------------------------------------------------------
# One-time parameter conditioning (hoisted out of the kernel hot path).
# ----------------------------------------------------------------------------
def _condition_theta(theta, ei, ea, lane, gmin, gmax, is_first):
    """pLayer theta/W conditioning + folding of the [.,1,0] extension, the INV
    output affine, and the previous layer's ACT output affine."""
    ei0, ei1, ei2, ei3 = ei
    ea0, ea1, ea2, ea3 = ea

    theta = theta.astype(jnp.float32)
    n_in = theta.shape[0] - 2
    n_out = theta.shape[1]

    th = jnp.clip(theta, -gmax, gmax)
    th = jnp.where(jnp.abs(th) < gmin, 0.0, th)
    ath = jnp.abs(th)
    col_sum = jnp.sum(ath, axis=0, keepdims=True)
    # Guard: original divides by 0 (NaN) if a whole column is zeroed.
    W = ath / jnp.where(col_sum == 0.0, 1.0, col_sum)
    pos = (th >= 0.0).astype(jnp.float32)
    Wp = W * pos
    Wn = W * (1.0 - pos)

    # Actual layer input is a = alpha + beta * h  (h is the kernel carry):
    #   layer 0:    a = X            -> alpha = 0,   beta = 1
    #   layer l>0:  a = ea0 + ea1*h  -> alpha = ea0, beta = ea1
    alpha, beta = (0.0, 1.0) if is_first else (ea0, ea1)

    # Bias folds: the constant "ones" column of a_extend (the "zeros" column
    # contributes nothing since a_neg[:, -1] is forced to 0 in the original),
    # the alpha part of a @ Wp, and the -ei0 part of INV(a) @ Wn.
    inv_one = -(ei0 + ei1 * math.tanh((1.0 - ei2) * ei3))
    bias = (Wp[n_in, :] + inv_one * Wn[n_in, :]
            + alpha * jnp.sum(Wp[:n_in, :], axis=0)
            - ei0 * jnp.sum(Wn[:n_in, :], axis=0))

    # Zero-padded, affine-folded weight blocks (zero rows >= n_in are what
    # keep the non-zero padded activation lanes inert).
    A = jnp.zeros((lane, lane), jnp.float32).at[:n_in, :n_out].set(beta * Wp[:n_in, :])
    B = jnp.zeros((lane, lane), jnp.float32).at[:n_in, :n_out].set(-ei1 * Wn[:n_in, :])
    b = jnp.zeros((lane,), jnp.float32).at[:n_out].set(bias)

    # tanh((a - ei2)*ei3) == tanh(h*scale + shift)
    scale = beta * ei3
    shift = (alpha - ei2) * ei3
    return A.astype(jnp.bfloat16), B.astype(jnp.bfloat16), b, (scale, shift)


def prepare_pnn_params(thetas, eta_inv_v, eta_act_v, gmin=GMIN, gmax=GMAX):
    """Precompute everything that does not depend on the batch.
    NOTE: eta is consumed ONLY here; re-run this if eta ever changes."""
    lane = max(_round_up(max(int(t.shape[0]) - 2, int(t.shape[1])), LANE)
               for t in thetas)
    ei = tuple(float(eta_inv_v[i]) for i in range(4))
    ea = tuple(float(eta_act_v[i]) for i in range(4))

    A_list, B_list, b_list, pre = [], [], [], []
    for idx, th in enumerate(thetas):
        A, B, b, ss = _condition_theta(th, ei, ea, lane, gmin, gmax, idx == 0)
        A_list.append(A)
        B_list.append(B)
        b_list.append(b)
        pre.append(ss)

    w_stack = jnp.stack([m for pair in zip(A_list, B_list) for m in pair])  # (2L,lane,lane) bf16
    b_stack = jnp.stack(b_list)                                             # (L, lane) f32
    scalars = (tuple(pre), (ea[3], -ea[2] * ea[3], ea[0], ea[1]))
    n_out_final = int(thetas[-1].shape[1])
    return w_stack, b_stack, scalars, lane, n_out_final


# ----------------------------------------------------------------------------
# Forward pass: one fused pallas_call for the whole network.
# ----------------------------------------------------------------------------
@functools.partial(jax.jit, static_argnames=("scalars", "lane", "n_out_final"))
def _pnn_apply(X, w_stack, b_stack, scalars, lane, n_out_final):
    pre_affine, (zscale, zshift, oa0, oa1) = scalars
    E, n0 = X.shape
    x_pad = jnp.zeros((E, lane), jnp.float32).at[:, :n0].set(X.astype(jnp.float32))

    kernel = _make_pnn_kernel(pre_affine, zscale, zshift, oa0, oa1)
    out = pl.pallas_call(
        kernel,
        out_shape=jax.ShapeDtypeStruct((E, lane), jnp.float32),
        in_specs=[pl.BlockSpec(memory_space=pltpu.MemorySpace.VMEM),   # x
                  pl.BlockSpec(memory_space=pltpu.MemorySpace.VMEM),   # weights (2L,lane,lane)
                  pl.BlockSpec(memory_space=pltpu.MemorySpace.VMEM)],  # biases  (L,lane)
        out_specs=pl.BlockSpec(memory_space=pltpu.MemorySpace.VMEM),
    )(x_pad, w_stack, b_stack)
    return out[:, :n_out_final]


def pnn_forward(X, params):
    w_stack, b_stack, scalars, lane, n_out_final = params
    return _pnn_apply(X, w_stack, b_stack,
                      scalars=scalars, lane=lane, n_out_final=n_out_final)


# ----------------------------------------------------------------------------
# Pure-JAX reference (mirrors the PyTorch pLayer/InvRT/TanhRT math, f32).
# ----------------------------------------------------------------------------
def pnn_reference(X, thetas, eta_inv_v, eta_act_v, gmin=GMIN, gmax=GMAX):
    a = X.astype(jnp.float32)
    for th in thetas:
        th = th.astype(jnp.float32)
        thc = jnp.clip(th, -gmax, gmax)
        thc = jnp.where(jnp.abs(thc) < gmin, 0.0, thc)
        ath = jnp.abs(thc)
        W = ath / jnp.sum(ath, axis=0, keepdims=True)
        pos = (thc >= 0.0).astype(jnp.float32)
        neg = 1.0 - pos
        E = a.shape[0]
        a_ext = jnp.concatenate(
            [a, jnp.ones((E, 1), jnp.float32), jnp.zeros((E, 1), jnp.float32)], axis=1)
        a_neg = -(eta_inv_v[0] + eta_inv_v[1]
                  * jnp.tanh((a_ext - eta_inv_v[2]) * eta_inv_v[3]))
        a_neg = a_neg.at[:, -1].set(0.0)
        z = a_ext @ (W * pos) + a_neg @ (W * neg)
        a = eta_act_v[0] + eta_act_v[1] * jnp.tanh((z - eta_act_v[2]) * eta_act_v[3])
    return a


# ----------------------------------------------------------------------------
# Deterministic synthetic replacements for the .pt "estimator" packages (glue)
# ----------------------------------------------------------------------------
def _init_mlp(key, d_in, d_h, d_out):
    k1, k2 = jax.random.split(key)
    w1 = jax.random.normal(k1, (d_in, d_h), jnp.float32) * 0.3
    w2 = jax.random.normal(k2, (d_h, d_out), jnp.float32) * 0.3
    return (w1, jnp.zeros((d_h,), jnp.float32), w2, jnp.zeros((d_out,), jnp.float32))


def _mlp_sigmoid(params, x):
    w1, b1, w2, b2 = params
    h = jnp.tanh(x @ w1 + b1)
    return jax.nn.sigmoid(h @ w2 + b2)


def inv_eta(rt_raw, X_min, X_max, Y_min, Y_max, est_params):
    """InvRT.eta : rt_raw is the 7-element rt_ parameter."""
    s = jax.nn.sigmoid(rt_raw)
    idx = jnp.array([0, 2, 4, 5, 6])
    RTn = jnp.zeros((10,), jnp.float32).at[idx].set(s[idx])
    RT = RTn * (X_max - X_min) + X_min
    R2 = RT[0] * s[1]
    R4 = RT[2] * s[3]
    RT7 = jnp.stack([RT[0], R2, RT[2], R4, RT[4], RT[5], RT[6]])
    RT10 = jnp.zeros((10,), jnp.float32).at[:7].set(RT7)
    RT10 = jnp.clip(RT10, X_min, X_max)                       # RT property clamp
    R1, R2c, R3, R4c, R5, Wd, Ld = (RT10[i] for i in range(7))
    k1, k2, k3 = R2c / R1, R4c / R3, Ld / Wd
    RT_ext = jnp.stack([R1, R2c, R3, R4c, R5, Wd, Ld, k1, k2, k3])
    RTn_ext = (RT_ext - X_min) / (X_max - X_min)
    eta_n = _mlp_sigmoid(est_params, RTn_ext)
    return eta_n * (Y_max - Y_min) + Y_min


def act_eta(rt_raw, X_min, X_max, Y_min, Y_max, est_params):
    """TanhRT.eta : rt_raw is the 6-element rt_ parameter."""
    s = jax.nn.sigmoid(rt_raw)
    RTn = jnp.zeros((9,), jnp.float32).at[:6].set(s)
    RT = (RTn * (X_max - X_min) + X_min)[:6]
    R1, R2, W1, L1, W2, L2 = (RT[i] for i in range(6))
    k1, k2, k3 = R2 / R1, L1 / W1, L2 / W2
    RT_ext = jnp.stack([R1, R2, W1, L1, W2, L2, k1, k2, k3])
    RTn_ext = (RT_ext - X_min) / (X_max - X_min)
    eta_n = _mlp_sigmoid(est_params, RTn_ext)
    return eta_n * (Y_max - Y_min) + Y_min


def init_theta(key, n_in, n_out, eta_act2, gmin=GMIN, gmax=GMAX):
    th = jax.random.uniform(key, (n_in + 2, n_out), jnp.float32) / 100.0 + gmin
    th = th.at[-1, :].add(gmax)
    th = th.at[-2, :].set(
        eta_act2 / (1.0 - eta_act2) * (jnp.sum(th[:-2, :], axis=0) + th[-1, :]))
    return th


# ----------------------------------------------------------------------------
if __name__ == "__main__":
    key = jax.random.PRNGKey(0)
    k_inv_mlp, k_act_mlp, k_th0, k_th1, k_x = jax.random.split(key, 5)

    # --- args-style deterministic constants ---------------------------------
    NEG_rt = jnp.array([0.1, 0.2, 0.3, 0.4, 0.5, 0.6, 0.7], jnp.float32)   # InvRT.rt_
    ACT_rt = jnp.array([0.15, 0.25, 0.35, 0.45, 0.55, 0.65], jnp.float32)  # TanhRT.rt_

    inv_X_min = jnp.linspace(0.2, 1.0, 10, dtype=jnp.float32)
    inv_X_max = jnp.linspace(2.0, 20.0, 10, dtype=jnp.float32)
    inv_Y_min = jnp.array([0.0, 0.5, 0.0, 0.5], jnp.float32)
    inv_Y_max = jnp.array([0.2, 1.5, 0.5, 2.0], jnp.float32)

    act_X_min = jnp.linspace(0.2, 1.0, 9, dtype=jnp.float32)
    act_X_max = jnp.linspace(2.0, 20.0, 9, dtype=jnp.float32)
    act_Y_min = jnp.array([0.0, 0.5, 0.1, 0.5], jnp.float32)
    act_Y_max = jnp.array([0.3, 1.0, 0.6, 2.0], jnp.float32)

    inv_mlp = _init_mlp(k_inv_mlp, 10, 16, 4)   # stand-in for eta_estimator (frozen)
    act_mlp = _init_mlp(k_act_mlp, 9, 16, 4)

    eta_inv_v = inv_eta(NEG_rt, inv_X_min, inv_X_max, inv_Y_min, inv_Y_max, inv_mlp)
    eta_act_v = act_eta(ACT_rt, act_X_min, act_X_max, act_Y_min, act_Y_max, act_mlp)

    # --- pNN topology & theta parameters ------------------------------------
    topology = [4, 32, 4]
    E = 8
    eta_act2 = float(eta_act_v[2])
    thetas = [
        init_theta(k_th0, topology[0], topology[1], eta_act2),   # (6, 32)
        init_theta(k_th1, topology[1], topology[2], eta_act2),   # (34, 4)
    ]

    X = jax.random.uniform(k_x, (E, topology[0]), jnp.float32)

    # one-time parameter conditioning (hoisted out of the kernel hot path)
    params = prepare_pnn_params(thetas, eta_inv_v, eta_act_v)

    out = pnn_forward(X, params)
    jax.block_until_ready(out)
    assert out.shape == (E, topology[-1])

    ref = pnn_reference(X, thetas, eta_inv_v, eta_act_v)
    # Tolerance accounts for the bf16 MXU operands (weights/activations are
    # quantised to bf16 for the dots; accumulation & all other math is f32).
    assert jnp.allclose(out, ref, atol=2e-2, rtol=2e-2), (
        f"max abs err {float(jnp.max(jnp.abs(out - ref)))}")

    print("KERNEL_OK")
</pallas_src>

<mosaic_0001>
module attributes {stable_mosaic.version = 11 : i64} {
  func.func @kernel(%arg0: memref<8x128xf32, #tpu.memory_space<vmem>>, %arg1: memref<4x128x128xbf16, #tpu.memory_space<vmem>>, %arg2: memref<2x128xf32, #tpu.memory_space<vmem>>, %arg3: memref<8x128xf32, #tpu.memory_space<vmem>>) attributes {dimension_semantics = [], scalar_prefetch = 0 : i64, scratch_operands = 0 : i64, tpu.core_type = #tpu.core_type<tc>} {
    %c0 = arith.constant 0 : index
    %c0_0 = arith.constant 0 : index
    %0 = vector.load %arg0[%c0, %c0_0] : memref<8x128xf32, #tpu.memory_space<vmem>>, vector<8x128xf32>
    %cst = arith.constant 1.09950447 : f32
    %1 = vector.broadcast %cst : f32 to vector<8x128xf32>
    %2 = arith.mulf %0, %1 : vector<8x128xf32>
    %cst_1 = arith.constant -0.305576921 : f32
    %3 = vector.broadcast %cst_1 : f32 to vector<8x128xf32>
    %4 = arith.addf %2, %3 : vector<8x128xf32>
    %5 = math.tanh %4 : vector<8x128xf32>
    %6 = arith.truncf %0 : vector<8x128xf32> to vector<8x128xbf16>
    %c0_2 = arith.constant 0 : index
    %c0_3 = arith.constant 0 : index
    %c0_4 = arith.constant 0 : index
    %7 = vector.load %arg1[%c0_2, %c0_3, %c0_4] : memref<4x128x128xbf16, #tpu.memory_space<vmem>>, vector<1x128x128xbf16>
    %8 = vector.shape_cast %7 : vector<1x128x128xbf16> to vector<128x128xbf16>
    %cst_5 = arith.constant dense<0.000000e+00> : vector<8x128xf32>
    %9 = tpu.matmul %6, %8, %cst_5 {dimension_numbers = #tpu.dot_dimension_numbers<[1], [0], [0], [1], [0, 0, 1, 1], [], []>} : vector<8x128xbf16>, vector<128x128xbf16>, vector<8x128xf32> -> vector<8x128xf32>
    %10 = arith.truncf %5 : vector<8x128xf32> to vector<8x128xbf16>
    %c1 = arith.constant 1 : index
    %c0_6 = arith.constant 0 : index
    %c0_7 = arith.constant 0 : index
    %11 = vector.load %arg1[%c1, %c0_6, %c0_7] : memref<4x128x128xbf16, #tpu.memory_space<vmem>>, vector<1x128x128xbf16>
    %12 = vector.shape_cast %11 : vector<1x128x128xbf16> to vector<128x128xbf16>
    %cst_8 = arith.constant dense<0.000000e+00> : vector<8x128xf32>
    %13 = tpu.matmul %10, %12, %cst_8 {dimension_numbers = #tpu.dot_dimension_numbers<[1], [0], [0], [1], [0, 0, 1, 1], [], []>} : vector<8x128xbf16>, vector<128x128xbf16>, vector<8x128xf32> -> vector<8x128xf32>
    %14 = arith.addf %9, %13 : vector<8x128xf32>
    %c0_9 = arith.constant 0 : index
    %c0_10 = arith.constant 0 : index
    %15 = vector.load %arg2[%c0_9, %c0_10] : memref<2x128xf32, #tpu.memory_space<vmem>>, vector<1x128xf32>
    %16 = vector.broadcast %15 : vector<1x128xf32> to vector<8x128xf32>
    %17 = arith.addf %14, %16 : vector<8x128xf32>
    %cst_11 = arith.constant 1.35036492 : f32
    %18 = vector.broadcast %cst_11 : f32 to vector<8x128xf32>
    %19 = arith.mulf %17, %18 : vector<8x128xf32>
    %cst_12 = arith.constant -0.458957344 : f32
    %20 = vector.broadcast %cst_12 : f32 to vector<8x128xf32>
    %21 = arith.addf %19, %20 : vector<8x128xf32>
    %22 = math.tanh %21 : vector<8x128xf32>
    %cst_13 = arith.constant 0.806339323 : f32
    %23 = vector.broadcast %cst_13 : f32 to vector<8x128xf32>
    %24 = arith.mulf %22, %23 : vector<8x128xf32>
    %cst_14 = arith.constant -0.0634824261 : f32
    %25 = vector.broadcast %cst_14 : f32 to vector<8x128xf32>
    %26 = arith.addf %24, %25 : vector<8x128xf32>
    %27 = math.tanh %26 : vector<8x128xf32>
    %28 = arith.truncf %22 : vector<8x128xf32> to vector<8x128xbf16>
    %c2 = arith.constant 2 : index
    %c0_15 = arith.constant 0 : index
    %c0_16 = arith.constant 0 : index
    %29 = vector.load %arg1[%c2, %c0_15, %c0_16] : memref<4x128x128xbf16, #tpu.memory_space<vmem>>, vector<1x128x128xbf16>
    %30 = vector.shape_cast %29 : vector<1x128x128xbf16> to vector<128x128xbf16>
    %cst_17 = arith.constant dense<0.000000e+00> : vector<8x128xf32>
    %31 = tpu.matmul %28, %30, %cst_17 {dimension_numbers = #tpu.dot_dimension_numbers<[1], [0], [0], [1], [0, 0, 1, 1], [], []>} : vector<8x128xbf16>, vector<128x128xbf16>, vector<8x128xf32> -> vector<8x128xf32>
    %32 = arith.truncf %27 : vector<8x128xf32> to vector<8x128xbf16>
    %c3 = arith.constant 3 : index
    %c0_18 = arith.constant 0 : index
    %c0_19 = arith.constant 0 : index
    %33 = vector.load %arg1[%c3, %c0_18, %c0_19] : memref<4x128x128xbf16, #tpu.memory_space<vmem>>, vector<1x128x128xbf16>
    %34 = vector.shape_cast %33 : vector<1x128x128xbf16> to vector<128x128xbf16>
    %cst_20 = arith.constant dense<0.000000e+00> : vector<8x128xf32>
    %35 = tpu.matmul %32, %34, %cst_20 {dimension_numbers = #tpu.dot_dimension_numbers<[1], [0], [0], [1], [0, 0, 1, 1], [], []>} : vector<8x128xbf16>, vector<128x128xbf16>, vector<8x128xf32> -> vector<8x128xf32>
    %36 = arith.addf %31, %35 : vector<8x128xf32>
    %c1_21 = arith.constant 1 : index
    %c0_22 = arith.constant 0 : index
    %37 = vector.load %arg2[%c1_21, %c0_22] : memref<2x128xf32, #tpu.memory_space<vmem>>, vector<1x128xf32>
    %38 = vector.broadcast %37 : vector<1x128xf32> to vector<8x128xf32>
    %39 = arith.addf %36, %38 : vector<8x128xf32>
    %cst_23 = arith.constant 1.35036492 : f32
    %40 = vector.broadcast %cst_23 : f32 to vector<8x128xf32>
    %41 = arith.mulf %39, %40 : vector<8x128xf32>
    %cst_24 = arith.constant -0.458957344 : f32
    %42 = vector.broadcast %cst_24 : f32 to vector<8x128xf32>
    %43 = arith.addf %41, %42 : vector<8x128xf32>
    %44 = math.tanh %43 : vector<8x128xf32>
    %cst_25 = arith.constant 0.733366132 : f32
    %45 = vector.broadcast %cst_25 : f32 to vector<8x128xf32>
    %46 = arith.mulf %45, %44 : vector<8x128xf32>
    %cst_26 = arith.constant 0.220185086 : f32
    %47 = vector.broadcast %cst_26 : f32 to vector<8x128xf32>
    %48 = arith.addf %47, %46 : vector<8x128xf32>
    %c0_27 = arith.constant 0 : index
    %c0_28 = arith.constant 0 : index
    %49 = vector.load %arg3[%c0_27, %c0_28] : memref<8x128xf32, #tpu.memory_space<vmem>>, vector<8x128xf32>
    tpu.vector_store %arg3[%c0_27, %c0_28], %48 {strides = array<i32>} : memref<8x128xf32, #tpu.memory_space<vmem>>, vector<8x128xf32>,
    return
  }
}

</mosaic_0001>

<llo_original>
// kernel: _pnn_apply.1
$region0: #{_pnn_apply.1}
  #allocation0 [shape = 'u32[]', space=smem, size = 0x4, offset = 0x4, fixed_abs, tag = 'smem constant byte address 0x4 - core index']
  #allocation1 [shape = 'u32[144,128]{1,0:T(1,128)}', space=vmem, size = 0x12000, scoped, tag = 'internal scratch']
  %s0 = inlined_call_operand.vmem [shape: f32[8,128], index: 0, kind: input, shape index: {}]
  %s1 = inlined_call_operand.hbm [shape: bf16[4,128,128], index: 1, kind: input, shape index: {}]
  %s2 = inlined_call_operand.vmem [shape: f32[2,128], index: 2, kind: input, shape index: {}]
  %s3 = inlined_call_operand.vmem [shape: f32[8,128], index: 3, kind: output, shape index: {}]
  %s4 = sld [smem:[#allocation0]]
  $region26: #{_pnn_apply.1} parent=0
    _
  %s6 = ssub.s32 1, %s4
  %s7 = scalar_select 0, %s6, %s4
  $region1: #{_pnn_apply.1} parent=0
    #allocation2 [shape = 'u8[131072]{0}', space=vmem, size = 0x20000, scoped, tag = 'input window, operand 1, single buffered']
    #allocation3 [shape = 's32[1]{0}', space=sflag, size = 0x4, scoped, tag = 'scoped memory for _pnn_apply.1']
    %8 = vsyncpa [#allocation3], 0
    // Predicated region
    $region2: #{_pnn_apply.1} parent=1 // pred_check
      _
    $region3: #{_pnn_apply.1} parent=1 // pred_check_branch
      %10 = sbr.rel (0) target = $region5
    $region4: #{_pnn_apply.1} parent=1 // pred_region
      _
    $region5: #{_pnn_apply.1} parent=1 // pred_fallthru
      _
    // Predicated region
    $region6: #{_pnn_apply.1} parent=1 // pred_check
      _
    $region7: #{_pnn_apply.1} parent=1 // pred_check_branch
      %12 = sbr.rel (0) target = $region9
    $region8: #{_pnn_apply.1} parent=1 // pred_region
      %s14 = ssub.s32 4096, 4096
      %15 = vsyncadd [#allocation3], %s14
      %s16 = sshll.u32 [#allocation2], 4
      %s17 = int_to_ptr.vmem [resolvable:$true] %s16
      %22 = dma.hbm_to_vmem [thread:$0]  %s1, 4096, %s17, [#allocation3], 64, 64, 4
    $region9: #{_pnn_apply.1} parent=1 // pred_fallthru
      _
    // Predicated region
    $region10: #{_pnn_apply.1} parent=1 // pred_check
      _
    $region11: #{_pnn_apply.1} parent=1 // pred_check_branch
      %24 = sbr.rel (0) target = $region13
    $region12: #{_pnn_apply.1} parent=1 // pred_region
      _
    $region13: #{_pnn_apply.1} parent=1 // pred_fallthru
      _
    // Predicated region
    $region14: #{_pnn_apply.1} parent=1 // pred_check
      _
    $region15: #{_pnn_apply.1} parent=1 // pred_check_branch
      %26 = sbr.rel (0) target = $region17
    $region16: #{_pnn_apply.1} parent=1 // pred_region
      %27 = dma.done [#allocation3], 4096
    $region17: #{_pnn_apply.1} parent=1 // pred_fallthru
      _
    %v29 = vld [vmem:[%s0] sm:$0xff]
    %v30 = vmul.f32 %v29, 1.0995045
    %v31 = vadd.f32 %v30, -0.30557692
    %v32 = vtanh.pop %v31
    %v33 = vpack.c.bf16 %v29, %v29
    %v34 = vld [vmem:[#allocation2] sm:$0xf]
    %v35 = vld [vmem:[#allocation2 + $0x4] sm:$0xf]
    %v36 = vld [vmem:[#allocation2 + $0x8] sm:$0xf]
    %v37 = vld [vmem:[#allocation2 + $0xc] sm:$0xf]
    %v38 = vld [vmem:[#allocation2 + $0x10] sm:$0xf]
    %v39 = vld [vmem:[#allocation2 + $0x14] sm:$0xf]
    %v40 = vld [vmem:[#allocation2 + $0x18] sm:$0xf]
    %v41 = vld [vmem:[#allocation2 + $0x1c] sm:$0xf]
    %v42 = vld [vmem:[#allocation2 + $0x20] sm:$0xf]
    %v43 = vld [vmem:[#allocation2 + $0x24] sm:$0xf]
    %v44 = vld [vmem:[#allocation2 + $0x28] sm:$0xf]
    %v45 = vld [vmem:[#allocation2 + $0x2c] sm:$0xf]
    %v46 = vld [vmem:[#allocation2 + $0x30] sm:$0xf]
    %v47 = vld [vmem:[#allocation2 + $0x34] sm:$0xf]
    %v48 = vld [vmem:[#allocation2 + $0x38] sm:$0xf]
    %v49 = vld [vmem:[#allocation2 + $0x3c] sm:$0xf]
    %v50 = vpack.c.bf16 %v32, %v32
    %s51 = scalar_lea.vmem [#allocation2], 64
    %v52 = vld [vmem:[%s51] sm:$0xf]
    %v53 = vld [vmem:[%s51 + $0x4] sm:$0xf]
    %v54 = vld [vmem:[%s51 + $0x8] sm:$0xf]
    %v55 = vld [vmem:[%s51 + $0xc] sm:$0xf]
    %v56 = vld [vmem:[%s51 + $0x10] sm:$0xf]
    %v57 = vld [vmem:[%s51 + $0x14] sm:$0xf]
    %v58 = vld [vmem:[%s51 + $0x18] sm:$0xf]
    %v59 = vld [vmem:[%s51 + $0x1c] sm:$0xf]
    %v60 = vld [vmem:[%s51 + $0x20] sm:$0xf]
    %v61 = vld [vmem:[%s51 + $0x24] sm:$0xf]
    %v62 = vld [vmem:[%s51 + $0x28] sm:$0xf]
    %v63 = vld [vmem:[%s51 + $0x2c] sm:$0xf]
    %v64 = vld [vmem:[%s51 + $0x30] sm:$0xf]
    %v65 = vld [vmem:[%s51 + $0x34] sm:$0xf]
    %v66 = vld [vmem:[%s51 + $0x38] sm:$0xf]
    %v67 = vld [vmem:[%s51 + $0x3c] sm:$0xf]
    %v84 = vunpack.c.l.b16 %v52
    %v85 = vunpack.c.l.b16 %v53
    %v86 = vunpack.c.l.b16 %v54
    %v87 = vunpack.c.l.b16 %v55
    %v88 = vunpack.c.l.b16 %v56
    %v89 = vunpack.c.l.b16 %v57
    %v90 = vunpack.c.l.b16 %v58
    %v91 = vunpack.c.l.b16 %v59
    %v92 = vunpack.c.l.b16 %v60
    %v93 = vunpack.c.l.b16 %v61
    %v94 = vunpack.c.l.b16 %v62
    %v95 = vunpack.c.l.b16 %v63
    %v96 = vunpack.c.l.b16 %v64
    %v97 = vunpack.c.l.b16 %v65
    %v98 = vunpack.c.l.b16 %v66
    %v99 = vunpack.c.l.b16 %v67
    %v100 = vpack.c.b16 %v85, %v84
    %v101 = vpack.c.b16 %v87, %v86
    %v102 = vpack.c.b16 %v89, %v88
    %v103 = vpack.c.b16 %v91, %v90
    %v104 = vpack.c.b16 %v93, %v92
    %v105 = vpack.c.b16 %v95, %v94
    %v106 = vpack.c.b16 %v97, %v96
    %v107 = vpack.c.b16 %v99, %v98
    %116 = vmatprep.subr.bf16.mxu0 0
    %117 = vmatpush1.bf16.msra.mxu0 %v100
    %118 = vmatprep.subr.bf16.mxu0 0
    %119 = vmatpush1.bf16.msra.mxu0 %v101
    %120 = vmatprep.subr.bf16.mxu0 0
    %121 = vmatpush1.bf16.msra.mxu0 %v102
    %122 = vmatprep.subr.bf16.mxu0 0
    %123 = vmatpush1.bf16.msra.mxu0 %v103
    %124 = vmatprep.subr.bf16.mxu0 0
    %125 = vmatpush1.bf16.msra.mxu0 %v104
    %126 = vmatprep.subr.bf16.mxu0 0
    %127 = vmatpush1.bf16.msra.mxu0 %v105
    %128 = vmatprep.subr.bf16.mxu0 0
    %129 = vmatpush1.bf16.msra.mxu0 %v106
    %130 = vmatprep.subr.bf16.mxu0 0
    %131 = vmatpush1.bf16.msra.mxu0 %v107
    %132 = vmatprep.subr.bf16.mxu0 0
    %133 = vmatpush1.bf16.msra.mxu0 0
    %134 = vmatprep.subr.bf16.mxu0 0
    %135 = vmatpush1.bf16.msra.mxu0 0
    %136 = vmatprep.subr.bf16.mxu0 0
    %137 = vmatpush1.bf16.msra.mxu0 0
    %138 = vmatprep.subr.bf16.mxu0 0
    %139 = vmatpush1.bf16.msra.mxu0 0
    %140 = vmatprep.subr.bf16.mxu0 0
    %141 = vmatpush1.bf16.msra.mxu0 0
    %142 = vmatprep.subr.bf16.mxu0 0
    %143 = vmatpush1.bf16.msra.mxu0 0
    %144 = vmatprep.subr.bf16.mxu0 0
    %145 = vmatpush1.bf16.msra.mxu0 0
    %146 = vmatprep.subr.bf16.mxu0 0
    %147 = vmatpush1.bf16.msra.mxu0 0
    %148 = vmatprep.mubr.bf16.mxu0 0
    %149 = vmatmul.mubr.bf16.gmra.mrb[0].mxu0 %v50
    %v150 = vpop.f32.mrb[0].mxu0
    %v151 = vadd.f32 0.0, %v150
    %v152 = vpop.f32.mrb[0].mxu0
    %v153 = vpop.f32.mrb[0].mxu0
    %v154 = vpop.f32.mrb[0].mxu0
    %155 = vdwg.mxu0
    %v172 = vunpack.c.l.b16 %v34
    %v173 = vunpack.c.l.b16 %v35
    %v174 = vunpack.c.l.b16 %v36
    %v175 = vunpack.c.l.b16 %v37
    %v176 = vunpack.c.l.b16 %v38
    %v177 = vunpack.c.l.b16 %v39
    %v178 = vunpack.c.l.b16 %v40
    %v179 = vunpack.c.l.b16 %v41
    %v180 = vunpack.c.l.b16 %v42
    %v181 = vunpack.c.l.b16 %v43
    %v182 = vunpack.c.l.b16 %v44
    %v183 = vunpack.c.l.b16 %v45
    %v184 = vunpack.c.l.b16 %v46
    %v185 = vunpack.c.l.b16 %v47
    %v186 = vunpack.c.l.b16 %v48
    %v187 = vunpack.c.l.b16 %v49
    %v188 = vpack.c.b16 %v173, %v172
    %v189 = vpack.c.b16 %v175, %v174
    %v190 = vpack.c.b16 %v177, %v176
    %v191 = vpack.c.b16 %v179, %v178
    %v192 = vpack.c.b16 %v181, %v180
    %v193 = vpack.c.b16 %v183, %v182
    %v194 = vpack.c.b16 %v185, %v184
    %v195 = vpack.c.b16 %v187, %v186
    %204 = vmatprep.subr.bf16.mxu0 0
    %205 = vmatpush1.bf16.msra.mxu0 %v188
    %206 = vmatprep.subr.bf16.mxu0 0
    %207 = vmatpush1.bf16.msra.mxu0 %v189
    %208 = vmatprep.subr.bf16.mxu0 0
    %209 = vmatpush1.bf16.msra.mxu0 %v190
    %210 = vmatprep.subr.bf16.mxu0 0
    %211 = vmatpush1.bf16.msra.mxu0 %v191
    %212 = vmatprep.subr.bf16.mxu0 0
    %213 = vmatpush1.bf16.msra.mxu0 %v192
    %214 = vmatprep.subr.bf16.mxu0 0
    %215 = vmatpush1.bf16.msra.mxu0 %v193
    %216 = vmatprep.subr.bf16.mxu0 0
    %217 = vmatpush1.bf16.msra.mxu0 %v194
    %218 = vmatprep.subr.bf16.mxu0 0
    %219 = vmatpush1.bf16.msra.mxu0 %v195
    %220 = vmatprep.subr.bf16.mxu0 0
    %221 = vmatpush1.bf16.msra.mxu0 0
    %222 = vmatprep.subr.bf16.mxu0 0
    %223 = vmatpush1.bf16.msra.mxu0 0
    %224 = vmatprep.subr.bf16.mxu0 0
    %225 = vmatpush1.bf16.msra.mxu0 0
    %226 = vmatprep.subr.bf16.mxu0 0
    %227 = vmatpush1.bf16.msra.mxu0 0
    %228 = vmatprep.subr.bf16.mxu0 0
    %229 = vmatpush1.bf16.msra.mxu0 0
    %230 = vmatprep.subr.bf16.mxu0 0
    %231 = vmatpush1.bf16.msra.mxu0 0
    %232 = vmatprep.subr.bf16.mxu0 0
    %233 = vmatpush1.bf16.msra.mxu0 0
    %234 = vmatprep.subr.bf16.mxu0 0
    %235 = vmatpush1.bf16.msra.mxu0 0
    %236 = vmatprep.mubr.bf16.mxu0 0
    %237 = vmatmul.mubr.bf16.gmra.mrb[0].mxu0 %v33
    %v238 = vpop.f32.mrb[0].mxu0
    %v239 = vadd.f32 %v151, %v238
    %v240 = vpop.f32.mrb[0].mxu0
    %v241 = vpop.f32.mrb[0].mxu0
    %v242 = vpop.f32.mrb[0].mxu0
    %243 = vdwg.mxu0
    %v244 = vld [vmem:[%s2] sm:$0x1]
    %v245 = vlaneseq
    %v246 = vshrl.u32 %v245, 7
    %v247 = vsub.s32 0, %v246
    %v248 = vrot.slane %v244, %v247
    %v249 = vadd.f32 %v239, %v248
    %v250 = vmul.f32 %v249, 1.3503649
    %v251 = vadd.f32 %v250, -0.45895734
    %v252 = vtanh.pop %v251
    %v253 = vmul.f32 %v252, 0.8063393
    %v254 = vadd.f32 %v253, -0.063482426
    %v255 = vtanh.pop %v254
    %v256 = vpack.c.bf16 %v252, %v252
    %s257 = scalar_lea.vmem [#allocation2], 128
    %v258 = vld [vmem:[%s257] sm:$0xf]
    %v259 = vld [vmem:[%s257 + $0x4] sm:$0xf]
    %v260 = vld [vmem:[%s257 + $0x8] sm:$0xf]
    %v261 = vld [vmem:[%s257 + $0xc] sm:$0xf]
    %v262 = vld [vmem:[%s257 + $0x10] sm:$0xf]
    %v263 = vld [vmem:[%s257 + $0x14] sm:$0xf]
    %v264 = vld [vmem:[%s257 + $0x18] sm:$0xf]
    %v265 = vld [vmem:[%s257 + $0x1c] sm:$0xf]
    %v266 = vld [vmem:[%s257 + $0x20] sm:$0xf]
    %v267 = vld [vmem:[%s257 + $0x24] sm:$0xf]
    %v268 = vld [vmem:[%s257 + $0x28] sm:$0xf]
    %v269 = vld [vmem:[%s257 + $0x2c] sm:$0xf]
    %v270 = vld [vmem:[%s257 + $0x30] sm:$0xf]
    %v271 = vld [vmem:[%s257 + $0x34] sm:$0xf]
    %v272 = vld [vmem:[%s257 + $0x38] sm:$0xf]
    %v273 = vld [vmem:[%s257 + $0x3c] sm:$0xf]
    %v274 = vpack.c.bf16 %v255, %v255
    %s275 = scalar_lea.vmem [#allocation2], 192
    %v276 = vld [vmem:[%s275] sm:$0xf]
    %v277 = vld [vmem:[%s275 + $0x4] sm:$0xf]
    %v278 = vld [vmem:[%s275 + $0x8] sm:$0xf]
    %v279 = vld [vmem:[%s275 + $0xc] sm:$0xf]
    %v280 = vld [vmem:[%s275 + $0x10] sm:$0xf]
    %v281 = vld [vmem:[%s275 + $0x14] sm:$0xf]
    %v282 = vld [vmem:[%s275 + $0x18] sm:$0xf]
    %v283 = vld [vmem:[%s275 + $0x1c] sm:$0xf]
    %v284 = vld [vmem:[%s275 + $0x20] sm:$0xf]
    %v285 = vld [vmem:[%s275 + $0x24] sm:$0xf]
    %v286 = vld [vmem:[%s275 + $0x28] sm:$0xf]
    %v287 = vld [vmem:[%s275 + $0x2c] sm:$0xf]
    %v288 = vld [vmem:[%s275 + $0x30] sm:$0xf]
    %v289 = vld [vmem:[%s275 + $0x34] sm:$0xf]
    %v290 = vld [vmem:[%s275 + $0x38] sm:$0xf]
    %v291 = vld [vmem:[%s275 + $0x3c] sm:$0xf]
    %v308 = vunpack.c.l.b16 %v276
    %v309 = vunpack.c.l.b16 %v277
    %v310 = vunpack.c.l.b16 %v278
    %v311 = vunpack.c.l.b16 %v279
    %v312 = vunpack.c.l.b16 %v280
    %v313 = vunpack.c.l.b16 %v281
    %v314 = vunpack.c.l.b16 %v282
    %v315 = vunpack.c.l.b16 %v283
    %v316 = vunpack.c.l.b16 %v284
    %v317 = vunpack.c.l.b16 %v285
    %v318 = vunpack.c.l.b16 %v286
    %v319 = vunpack.c.l.b16 %v287
    %v320 = vunpack.c.l.b16 %v288
    %v321 = vunpack.c.l.b16 %v289
    %v322 = vunpack.c.l.b16 %v290
    %v323 = vunpack.c.l.b16 %v291
    %v324 = vpack.c.b16 %v309, %v308
    %v325 = vpack.c.b16 %v311, %v310
    %v326 = vpack.c.b16 %v313, %v312
    %v327 = vpack.c.b16 %v315, %v314
    %v328 = vpack.c.b16 %v317, %v316
    %v329 = vpack.c.b16 %v319, %v318
    %v330 = vpack.c.b16 %v321, %v320
    %v331 = vpack.c.b16 %v323, %v322
    %340 = vmatprep.subr.bf16.mxu0 0
    %341 = vmatpush1.bf16.msra.mxu0 %v324
    %342 = vmatprep.subr.bf16.mxu0 0
    %343 = vmatpush1.bf16.msra.mxu0 %v325
    %344 = vmatprep.subr.bf16.mxu0 0
    %345 = vmatpush1.bf16.msra.mxu0 %v326
    %346 = vmatprep.subr.bf16.mxu0 0
    %347 = vmatpush1.bf16.msra.mxu0 %v327
    %348 = vmatprep.subr.bf16.mxu0 0
    %349 = vmatpush1.bf16.msra.mxu0 %v328
    %350 = vmatprep.subr.bf16.mxu0 0
    %351 = vmatpush1.bf16.msra.mxu0 %v329
    %352 = vmatprep.subr.bf16.mxu0 0
    %353 = vmatpush1.bf16.msra.mxu0 %v330
    %354 = vmatprep.subr.bf16.mxu0 0
    %355 = vmatpush1.bf16.msra.mxu0 %v331
    %356 = vmatprep.subr.bf16.mxu0 0
    %357 = vmatpush1.bf16.msra.mxu0 0
    %358 = vmatprep.subr.bf16.mxu0 0
    %359 = vmatpush1.bf16.msra.mxu0 0
    %360 = vmatprep.subr.bf16.mxu0 0
    %361 = vmatpush1.bf16.msra.mxu0 0
    %362 = vmatprep.subr.bf16.mxu0 0
    %363 = vmatpush1.bf16.msra.mxu0 0
    %364 = vmatprep.subr.bf16.mxu0 0
    %365 = vmatpush1.bf16.msra.mxu0 0
    %366 = vmatprep.subr.bf16.mxu0 0
    %367 = vmatpush1.bf16.msra.mxu0 0
    %368 = vmatprep.subr.bf16.mxu0 0
    %369 = vmatpush1.bf16.msra.mxu0 0
    %370 = vmatprep.subr.bf16.mxu0 0
    %371 = vmatpush1.bf16.msra.mxu0 0
    %372 = vmatprep.mubr.bf16.mxu0 0
    %373 = vmatmul.mubr.bf16.gmra.mrb[0].mxu0 %v274
    %v374 = vpop.f32.mrb[0].mxu0
    %v375 = vadd.f32 0.0, %v374
    %v376 = vpop.f32.mrb[0].mxu0
    %v377 = vpop.f32.mrb[0].mxu0
    %v378 = vpop.f32.mrb[0].mxu0
    %379 = vdwg.mxu0
    %v396 = vunpack.c.l.b16 %v258
    %v397 = vunpack.c.l.b16 %v259
    %v398 = vunpack.c.l.b16 %v260
    %v399 = vunpack.c.l.b16 %v261
    %v400 = vunpack.c.l.b16 %v262
    %v401 = vunpack.c.l.b16 %v263
    %v402 = vunpack.c.l.b16 %v264
    %v403 = vunpack.c.l.b16 %v265
    %v404 = vunpack.c.l.b16 %v266
    %v405 = vunpack.c.l.b16 %v267
    %v406 = vunpack.c.l.b16 %v268
    %v407 = vunpack.c.l.b16 %v269
    %v408 = vunpack.c.l.b16 %v270
    %v409 = vunpack.c.l.b16 %v271
    %v410 = vunpack.c.l.b16 %v272
    %v411 = vunpack.c.l.b16 %v273
    %v412 = vpack.c.b16 %v397, %v396
    %v413 = vpack.c.b16 %v399, %v398
    %v414 = vpack.c.b16 %v401, %v400
    %v415 = vpack.c.b16 %v403, %v402
    %v416 = vpack.c.b16 %v405, %v404
    %v417 = vpack.c.b16 %v407, %v406
    %v418 = vpack.c.b16 %v409, %v408
    %v419 = vpack.c.b16 %v411, %v410
    %428 = vmatprep.subr.bf16.mxu0 0
    %429 = vmatpush1.bf16.msra.mxu0 %v412
    %430 = vmatprep.subr.bf16.mxu0 0
    %431 = vmatpush1.bf16.msra.mxu0 %v413
    %432 = vmatprep.subr.bf16.mxu0 0
    %433 = vmatpush1.bf16.msra.mxu0 %v414
    %434 = vmatprep.subr.bf16.mxu0 0
    %435 = vmatpush1.bf16.msra.mxu0 %v415
    %436 = vmatprep.subr.bf16.mxu0 0
    %437 = vmatpush1.bf16.msra.mxu0 %v416
    %438 = vmatprep.subr.bf16.mxu0 0
    %439 = vmatpush1.bf16.msra.mxu0 %v417
    %440 = vmatprep.subr.bf16.mxu0 0
    %441 = vmatpush1.bf16.msra.mxu0 %v418
    %442 = vmatprep.subr.bf16.mxu0 0
    %443 = vmatpush1.bf16.msra.mxu0 %v419
    %444 = vmatprep.subr.bf16.mxu0 0
    %445 = vmatpush1.bf16.msra.mxu0 0
    %446 = vmatprep.subr.bf16.mxu0 0
    %447 = vmatpush1.bf16.msra.mxu0 0
    %448 = vmatprep.subr.bf16.mxu0 0
    %449 = vmatpush1.bf16.msra.mxu0 0
    %450 = vmatprep.subr.bf16.mxu0 0
    %451 = vmatpush1.bf16.msra.mxu0 0
    %452 = vmatprep.subr.bf16.mxu0 0
    %453 = vmatpush1.bf16.msra.mxu0 0
    %454 = vmatprep.subr.bf16.mxu0 0
    %455 = vmatpush1.bf16.msra.mxu0 0
    %456 = vmatprep.subr.bf16.mxu0 0
    %457 = vmatpush1.bf16.msra.mxu0 0
    %458 = vmatprep.subr.bf16.mxu0 0
    %459 = vmatpush1.bf16.msra.mxu0 0
    %460 = vmatprep.mubr.bf16.mxu0 0
    %461 = vmatmul.mubr.bf16.gmra.mrb[0].mxu0 %v256
    %v462 = vpop.f32.mrb[0].mxu0
    %v463 = vadd.f32 %v375, %v462
    %v464 = vpop.f32.mrb[0].mxu0
    %v465 = vpop.f32.mrb[0].mxu0
    %v466 = vpop.f32.mrb[0].mxu0
    %467 = vdwg.mxu0
    %v468 = vld [vmem:[%s2 + $0x1] sm:$0x1]
    %v469 = vlaneseq
    %v470 = vshrl.u32 %v469, 7
    %v471 = vsub.s32 0, %v470
    %v472 = vrot.slane %v468, %v471
    %v473 = vadd.f32 %v463, %v472
    %v474 = vmul.f32 %v473, 1.3503649
    %v475 = vadd.f32 %v474, -0.45895734
    %v476 = vtanh.pop %v475
    %v477 = vmul.f32 %v476, 0.73336613
    %v478 = vadd.f32 %v477, 0.22018509
    %479 = vst [vmem:[%s3] sm:$0xff] %v478
    // Predicated region
    $region18: #{_pnn_apply.1} parent=1 // pred_check
      _
    $region19: #{_pnn_apply.1} parent=1 // pred_check_branch
      %481 = sbr.rel (0) target = $region21
    $region20: #{_pnn_apply.1} parent=1 // pred_region
      _
    $region21: #{_pnn_apply.1} parent=1 // pred_fallthru
      _
    // Predicated region
    $region22: #{_pnn_apply.1} parent=1 // pred_check
      _
    $region23: #{_pnn_apply.1} parent=1 // pred_check_branch
      %483 = sbr.rel (0) target = $region25
    $region24: #{_pnn_apply.1} parent=1 // pred_region
      _
    $region25: #{_pnn_apply.1} parent=1 // pred_fallthru
      _
    %484 = vsyncpa [#allocation3], 1

</llo_original>
